<compile_context>
chip_gen: v7x
topology: tpu7x:2x2x1
jax: 0.10.0
libtpu: 0.0.40
codegen_flags: <defaults>
</compile_context>

<pallas_src>
import jax
import jax.numpy as jnp
from jax.experimental import pallas as pl
from jax.experimental.pallas import tpu as pltpu


_EXP_ARG_CAP = 20.0  # exp(20)^4 ~ 5.5e34 < f32 max; sigmoid already saturated


def _round_up(a: int, m: int) -> int:
    return (a + m - 1) // m * m


def make_cln_model(B: float, eps: float = 0.5, tile_rows: int = 2048):
    """Builds the CLNModel forward pass with constants B, eps baked in (they
    are __init__ arguments of the PyTorch module, not tensor inputs).

    Returns (forward, forward_planar):
      forward(x):         x of shape (3,) or (N, 3) -> scalar / (N,) values.
      forward_planar(xp): xp of shape (3, rows, 128) already in the kernel's
                          native layout (skoX/skoY/skoZ planes, rows ideally a
                          multiple of 8) -> (rows, 128) f32; no wrapper-side
                          relayout (the high-throughput path).
    """
    assert tile_rows % 8 == 0 and tile_rows >= 8

    b_f = float(B)
    beps_f = float(B) * float(eps)

    def cln_kernel(x_ref, o_ref):
        # x_ref: (3, T, 128) tile -- one sublane/lane-dense plane per variable.
        # Compute in f32 regardless of storage dtype.
        skoX = x_ref[0].astype(jnp.float32)          # (T, 128)
        skoY = x_ref[1].astype(jnp.float32)
        skoZ = x_ref[2].astype(jnp.float32)

        b = jnp.float32(b_f)
        b_eps = jnp.float32(beps_f)
        cap = jnp.float32(_EXP_ARG_CAP)

        # c_i = 1 - sigmoid(B*(eps - t_i)) = 1 / (1 + exp(B*(eps - t_i)))
        a1 = b_eps - b * (1.0 - skoX - skoY - skoZ)  # t1 = 1 - X - Y - Z
        a2 = b_eps - b * skoZ                        # t2 = Z - 0
        a3 = b_eps - b * skoY                        # t3 = Y - 0
        a4 = b_eps - b * skoX                        # t4 = X - 0

        e1 = jnp.exp(jnp.minimum(a1, cap))
        e2 = jnp.exp(jnp.minimum(a2, cap))
        e3 = jnp.exp(jnp.minimum(a3, cap))
        e4 = jnp.exp(jnp.minimum(a4, cap))

        # prod t-norm of the four sigmoids: three VPU multiplies + one EUP
        # approximate reciprocal (no cross-sublane reduction).
        d = (1.0 + e1) * (1.0 + e2) * (1.0 + e3) * (1.0 + e4)
        o_ref[...] = pl.reciprocal(d, approx=True).astype(o_ref.dtype)

    def _plan(rows: int):
        """Pick (tile_rows_eff, rows_padded, num_tiles) for `rows` sublane
        rows: tiles are multiples of 8 rows, capped at tile_rows (VMEM), and
        split into >= 2 tiles when possible so both v7x TensorCores get work."""
        r8 = max(8, _round_up(rows, 8))
        if r8 <= tile_rows:
            if r8 >= 16 and (r8 // 2) % 8 == 0:
                t = r8 // 2                          # two equal tiles, no pad
            else:
                t = r8                               # single tile, no pad
            return t, r8, r8 // t
        r_pad = _round_up(r8, tile_rows)
        return tile_rows, r_pad, r_pad // tile_rows

    def _run(x_planar):
        # x_planar: (3, rows, 128), any float dtype.
        rows = x_planar.shape[1]
        t, r_pad, num_tiles = _plan(rows)
        if r_pad != rows:
            x_planar = jnp.pad(x_planar, ((0, 0), (0, r_pad - rows), (0, 0)))
        return pl.pallas_call(
            cln_kernel,
            out_shape=jax.ShapeDtypeStruct((r_pad, 128), jnp.float32),
            grid=(num_tiles,),
            in_specs=[pl.BlockSpec((3, t, 128), lambda i: (0, i, 0))],
            out_specs=pl.BlockSpec((t, 128), lambda i: (i, 0)),
            compiler_params=pltpu.CompilerParams(
                dimension_semantics=("parallel",)),
        )(x_planar)

    @jax.jit
    def forward_planar(x_planar):
        """Zero-relayout path: (3, rows, 128) in, (rows, 128) f32 out."""
        assert (x_planar.ndim == 3 and x_planar.shape[0] == 3
                and x_planar.shape[2] == 128)
        rows = x_planar.shape[1]
        return _run(x_planar)[:rows]

    @jax.jit
    def forward(x):
        """Module-compatible path: x is (3,) or (N, 3) -> scalar / (N,).
        Pays one XLA transpose+pad to reach the dense layout; produce
        candidates directly in (3, rows, 128) and use forward_planar to
        avoid it on the high-throughput path."""
        x = jnp.asarray(x)
        if not jnp.issubdtype(x.dtype, jnp.floating):
            x = x.astype(jnp.float32)
        single = x.ndim == 1
        xb = x[None, :] if single else x              # (N, 3)
        n = xb.shape[0]
        rows = max(8, _round_up(pl.cdiv(n, 128), 8))  # sublane-aligned rows
        flat = jnp.zeros((3, rows * 128), xb.dtype).at[:, :n].set(xb.T)
        out = _run(flat.reshape(3, rows, 128))        # (>=rows, 128)
        y = out.reshape(-1)[:n]
        return y[0] if single else y

    return forward, forward_planar


def _reference_forward(xb, B, eps=0.5):
    """Pure-JAX reference mirroring the PyTorch module (batched over rows)."""
    skoX, skoY, skoZ = xb[:, 0], xb[:, 1], xb[:, 2]

    def neg_le(t):
        return 1.0 - jax.nn.sigmoid(B * (eps - t))

    c1 = neg_le(1.0 + skoX * -1.0 + skoY * -1.0 - skoZ)
    c2 = neg_le(skoZ - 0.0)
    c3 = neg_le(skoY - 0.0)
    c4 = neg_le(skoX - 0.0)
    return c1 * c2 * c3 * c4


if __name__ == "__main__":
    key = jax.random.PRNGKey(0)
    kb, ks = jax.random.split(key)

    B = 5.0  # deterministic choice for the __init__ parameter B
    model, model_planar = make_cln_model(B, eps=0.5)

    # Batched evaluation: 2048 candidates -> 16 sublane rows -> 2-tile grid.
    x_batch = jax.random.uniform(kb, (2048, 3), minval=-10.0, maxval=10.0,
                                 dtype=jnp.float32)
    y_batch = jax.block_until_ready(model(x_batch))
    y_ref = _reference_forward(x_batch, B, eps=0.5)
    assert y_batch.shape == (2048,)
    assert jnp.allclose(y_batch, y_ref, rtol=2e-3, atol=1e-5), (
        float(jnp.max(jnp.abs(y_batch - y_ref))))

    # Zero-relayout planar path with the same data in (3, rows, 128) layout.
    x_planar = x_batch.T.reshape(3, 16, 128)
    y_planar = jax.block_until_ready(model_planar(x_planar))
    assert y_planar.shape == (16, 128)
    assert jnp.allclose(y_planar.reshape(-1), y_ref, rtol=2e-3, atol=1e-5)

    # Single assignment, matching the original module's x of shape (3,).
    x_single = jax.random.uniform(ks, (3,), minval=-10.0, maxval=10.0,
                                  dtype=jnp.float32)
    y_single = jax.block_until_ready(model(x_single))
    y_single_ref = _reference_forward(x_single[None, :], B, eps=0.5)[0]
    assert y_single.shape == ()
    assert jnp.allclose(y_single, y_single_ref, rtol=2e-3, atol=1e-5), (
        y_single, y_single_ref)

    # NOTE: the z3.Real('skoX'/'skoY'/'skoZ') declarations in the original file
    # are symbolic-solver glue and are not part of the tensor forward pass.
    print("KERNEL_OK")
</pallas_src>

<mosaic_0001>
module attributes {stable_mosaic.version = 11 : i64} {
  func.func @cln_kernel(%arg0: i32, %arg1: memref<3x8x128xf32, #tpu.memory_space<vmem>>, %arg2: memref<8x128xf32, #tpu.memory_space<vmem>>) attributes {dimension_semantics = [#tpu.dimension_semantics<parallel>], iteration_bounds = array<i64: 2>, scalar_prefetch = 0 : i64, scratch_operands = 0 : i64, tpu.core_type = #tpu.core_type<tc>, window_params = [{transform_indices = @transform_0, window_bounds = array<i64: 3, 8, 128>}, {transform_indices = @transform_1, window_bounds = array<i64: 8, 128>}]} {
    %c0 = arith.constant 0 : index
    %c0_0 = arith.constant 0 : index
    %c0_1 = arith.constant 0 : index
    %0 = vector.load %arg1[%c0, %c0_0, %c0_1] : memref<3x8x128xf32, #tpu.memory_space<vmem>>, vector<1x8x128xf32>
    %1 = vector.shape_cast %0 : vector<1x8x128xf32> to vector<8x128xf32>
    %c1 = arith.constant 1 : index
    %c0_2 = arith.constant 0 : index
    %c0_3 = arith.constant 0 : index
    %2 = vector.load %arg1[%c1, %c0_2, %c0_3] : memref<3x8x128xf32, #tpu.memory_space<vmem>>, vector<1x8x128xf32>
    %3 = vector.shape_cast %2 : vector<1x8x128xf32> to vector<8x128xf32>
    %c2 = arith.constant 2 : index
    %c0_4 = arith.constant 0 : index
    %c0_5 = arith.constant 0 : index
    %4 = vector.load %arg1[%c2, %c0_4, %c0_5] : memref<3x8x128xf32, #tpu.memory_space<vmem>>, vector<1x8x128xf32>
    %5 = vector.shape_cast %4 : vector<1x8x128xf32> to vector<8x128xf32>
    %cst = arith.constant 1.000000e+00 : f32
    %6 = vector.broadcast %cst : f32 to vector<8x128xf32>
    %7 = arith.subf %6, %1 : vector<8x128xf32>
    %8 = arith.subf %7, %3 : vector<8x128xf32>
    %9 = arith.subf %8, %5 : vector<8x128xf32>
    %cst_6 = arith.constant 5.000000e+00 : f32
    %10 = vector.broadcast %cst_6 : f32 to vector<8x128xf32>
    %11 = arith.mulf %10, %9 : vector<8x128xf32>
    %cst_7 = arith.constant 2.500000e+00 : f32
    %12 = vector.broadcast %cst_7 : f32 to vector<8x128xf32>
    %13 = arith.subf %12, %11 : vector<8x128xf32>
    %cst_8 = arith.constant 5.000000e+00 : f32
    %14 = vector.broadcast %cst_8 : f32 to vector<8x128xf32>
    %15 = arith.mulf %14, %5 : vector<8x128xf32>
    %cst_9 = arith.constant 2.500000e+00 : f32
    %16 = vector.broadcast %cst_9 : f32 to vector<8x128xf32>
    %17 = arith.subf %16, %15 : vector<8x128xf32>
    %cst_10 = arith.constant 5.000000e+00 : f32
    %18 = vector.broadcast %cst_10 : f32 to vector<8x128xf32>
    %19 = arith.mulf %18, %3 : vector<8x128xf32>
    %cst_11 = arith.constant 2.500000e+00 : f32
    %20 = vector.broadcast %cst_11 : f32 to vector<8x128xf32>
    %21 = arith.subf %20, %19 : vector<8x128xf32>
    %cst_12 = arith.constant 5.000000e+00 : f32
    %22 = vector.broadcast %cst_12 : f32 to vector<8x128xf32>
    %23 = arith.mulf %22, %1 : vector<8x128xf32>
    %cst_13 = arith.constant 2.500000e+00 : f32
    %24 = vector.broadcast %cst_13 : f32 to vector<8x128xf32>
    %25 = arith.subf %24, %23 : vector<8x128xf32>
    %cst_14 = arith.constant 2.000000e+01 : f32
    %26 = vector.broadcast %cst_14 : f32 to vector<8x128xf32>
    %27 = arith.minimumf %13, %26 : vector<8x128xf32>
    %28 = math.exp %27 : vector<8x128xf32>
    %cst_15 = arith.constant 2.000000e+01 : f32
    %29 = vector.broadcast %cst_15 : f32 to vector<8x128xf32>
    %30 = arith.minimumf %17, %29 : vector<8x128xf32>
    %31 = math.exp %30 : vector<8x128xf32>
    %cst_16 = arith.constant 2.000000e+01 : f32
    %32 = vector.broadcast %cst_16 : f32 to vector<8x128xf32>
    %33 = arith.minimumf %21, %32 : vector<8x128xf32>
    %34 = math.exp %33 : vector<8x128xf32>
    %cst_17 = arith.constant 2.000000e+01 : f32
    %35 = vector.broadcast %cst_17 : f32 to vector<8x128xf32>
    %36 = arith.minimumf %25, %35 : vector<8x128xf32>
    %37 = math.exp %36 : vector<8x128xf32>
    %cst_18 = arith.constant 1.000000e+00 : f32
    %38 = vector.broadcast %cst_18 : f32 to vector<8x128xf32>
    %39 = arith.addf %38, %28 : vector<8x128xf32>
    %cst_19 = arith.constant 1.000000e+00 : f32
    %40 = vector.broadcast %cst_19 : f32 to vector<8x128xf32>
    %41 = arith.addf %40, %31 : vector<8x128xf32>
    %42 = arith.mulf %39, %41 : vector<8x128xf32>
    %cst_20 = arith.constant 1.000000e+00 : f32
    %43 = vector.broadcast %cst_20 : f32 to vector<8x128xf32>
    %44 = arith.addf %43, %34 : vector<8x128xf32>
    %45 = arith.mulf %42, %44 : vector<8x128xf32>
    %cst_21 = arith.constant 1.000000e+00 : f32
    %46 = vector.broadcast %cst_21 : f32 to vector<8x128xf32>
    %47 = arith.addf %46, %37 : vector<8x128xf32>
    %48 = arith.mulf %45, %47 : vector<8x128xf32>
    %49 = tpu.reciprocal %48 {approx = true} : vector<8x128xf32> -> vector<8x128xf32>
    %c0_22 = arith.constant 0 : index
    %c0_23 = arith.constant 0 : index
    %50 = vector.load %arg2[%c0_22, %c0_23] : memref<8x128xf32, #tpu.memory_space<vmem>>, vector<8x128xf32>
    tpu.vector_store %arg2[%c0_22, %c0_23], %49 {strides = array<i32>} : memref<8x128xf32, #tpu.memory_space<vmem>>, vector<8x128xf32>,
    return
  }
  func.func @transform_0(%arg0: i32) -> (i32, i32, i32) {
    %c0_i32 = arith.constant 0 : i32
    %c0_i32_0 = arith.constant 0 : i32
    %c0_i32_1 = arith.constant 0 : i32
    return %c0_i32, %arg0, %c0_i32_0 : i32, i32, i32
  }
  func.func @transform_1(%arg0: i32) -> (i32, i32) {
    %c0_i32 = arith.constant 0 : i32
    %c0_i32_0 = arith.constant 0 : i32
    return %arg0, %c0_i32 : i32, i32
  }
}

</mosaic_0001>

<llo_original>
// kernel: forward.1
$region0: #{forward.1}
  #allocation0 [shape = 'u32[]', space=smem, size = 0x4, offset = 0x4, fixed_abs, tag = 'smem constant byte address 0x4 - core index']
  #allocation1 [shape = 'u32[144,128]{1,0:T(1,128)}', space=vmem, size = 0x12000, scoped, tag = 'internal scratch']
  %s0 = inlined_call_operand.vmem [shape: f32[3,16,128], index: 0, kind: input, shape index: {}]
  %s1 = inlined_call_operand.hbm [shape: f32[16,128], index: 1, kind: output, shape index: {}]
  %s2 = sld [smem:[#allocation0]]
  $region75: #{forward.1} parent=0
    _
  %s4 = ssub.s32 1, %s2
  %s5 = scalar_select 0, %s4, %s2
  $region1: #{forward.1} parent=0
    #allocation2 [shape = 'u8[24576]{0}', space=vmem, size = 0x6000, scoped, tag = 'input window, operand 0']
    #allocation3 [shape = 'u8[8192]{0}', space=vmem, size = 0x2000, scoped, tag = 'output window, operand 0']
    #allocation4 [shape = 's32[2]{0}', space=sflag, size = 0x8, scoped, tag = 'scoped memory for forward.1']
    %6 = vsyncpa [#allocation4], 0
    %s7 = scalar_lea.sflag [#allocation4], 1
    %8 = vsyncpa %s7, 0
    loop: start=0, step=1, limit=4
    $region2: #{forward.1} parent=1 // loop_pre_header
      _
    $region3: #{forward.1} parent=1 // loop_header
      %s10 = sphi 0, %s14
      %p11 = scmp.ge.s32.totalorder %s10, 4
      %s20 = sphi 0, %s22
      %s23 = sphi 0, %s20
      %s24 = sphi 0, %s23
      %s40 = sphi 0, %s24
      %s46 = sphi 0, %s48
      %s49 = sphi 0, %s46
      %s50 = sphi 0, %s49
      %s66 = sphi 0, %s50
    $region4: #{forward.1} parent=1 // loop_header_branch
      %13 = sbr.rel (%p11) target = $region8
    $region5: #{forward.1} parent=1 // loop_body
      %s15 = ssub.s32 %s10, 1
      %s16 = ssub.s32 %s10, 2
      %s17 = sadd.s32 %s10, 1
      %s18 = ssub.s32 %s10, %s17
      %p19 = scmp.eq.s32.totalorder %s18, 0
      %s21 = sadd.s32 %s20, 1
      %s22 = scalar_select %p19, %s20, %s21
      %p25 = pneg %p19
      %p26 = scmp.eq.s32.totalorder %s10, 1
      %p27 = por %p25, %p26
      %p28 = scmp.ne.s32.totalorder %s20, %s23
      %p29 = scmp.eq.s32.totalorder %s10, 0
      %p30 = por %p28, %p29
      %p31 = scmp.ne.s32.totalorder %s20, %s23
      %p32 = scmp.eq.s32.totalorder %s15, 1
      %p33 = por %p31, %p32
      %p34 = scmp.ne.s32.totalorder %s23, %s24
      %p35 = scmp.eq.s32.totalorder %s15, 0
      %p36 = por %p34, %p35
      %p37 = scmp.ne.s32.totalorder %s23, %s24
      %p38 = scmp.eq.s32.totalorder %s16, 1
      %p39 = por %p37, %p38
      %p41 = scmp.ne.s32.totalorder %s24, %s40
      %p42 = scmp.eq.s32.totalorder %s16, 0
      %p43 = por %p41, %p42
      %s44 = ssub.s32 %s10, %s17
      %p45 = scmp.eq.s32.totalorder %s44, 0
      %s47 = sadd.s32 %s46, 1
      %s48 = scalar_select %p45, %s46, %s47
      %p51 = pneg %p45
      %p52 = scmp.eq.s32.totalorder %s10, 1
      %p53 = por %p51, %p52
      %p54 = scmp.ne.s32.totalorder %s46, %s49
      %p55 = scmp.eq.s32.totalorder %s10, 0
      %p56 = por %p54, %p55
      %p57 = scmp.ne.s32.totalorder %s46, %s49
      %p58 = scmp.eq.s32.totalorder %s15, 1
      %p59 = por %p57, %p58
      %p60 = scmp.ne.s32.totalorder %s49, %s50
      %p61 = scmp.eq.s32.totalorder %s15, 0
      %p62 = por %p60, %p61
      %p63 = scmp.ne.s32.totalorder %s49, %s50
      %p64 = scmp.eq.s32.totalorder %s16, 1
      %p65 = por %p63, %p64
      %p67 = scmp.ne.s32.totalorder %s50, %s66
      %p68 = scmp.eq.s32.totalorder %s16, 0
      %p69 = por %p67, %p68
      %p70 = scmp.le.s32.totalorder 1, %s10
      %p71 = scmp.lt.s32.totalorder %s10, 3
      %p72 = pnand %p70, %p71
      %p73 = pneg %p72
      // Predicated region
      $region9: #{forward.1} parent=5 // pred_check
        _
      $region10: #{forward.1} parent=5 // pred_check_branch
        %75 = sbr.rel (%p72) target = $region12
      $region11: #{forward.1} parent=5 // pred_region
        %s76 = ssub.s32 %s10, 1
      $region12: #{forward.1} parent=5 // pred_fallthru
        _
      %p77 = scmp.lt.s32.totalorder %s10, 2
      // Predicated region
      $region13: #{forward.1} parent=5 // pred_check
        %p78 = pneg %p77
      $region14: #{forward.1} parent=5 // pred_check_branch
        %80 = sbr.rel (%p78) target = $region16
      $region15: #{forward.1} parent=5 // pred_region
        // Predicated region
        $region17: #{forward.1} parent=15 // pred_check
          %p81 = pneg %p30
        $region18: #{forward.1} parent=15 // pred_check_branch
          %83 = sbr.rel (%p81) target = $region20
        $region19: #{forward.1} parent=15 // pred_region
          %s84 = sand.u32 %s20, 1
          %s85 = sand.u32 %s20, 1
          %s86 = smul.addr %s85, 24
          %s87 = scalar_lea.vmem [#allocation2], %s86
          %s88 = smul.addr %s10, 8
          %s89 = scalar_lea.vmem %s0, %s88
          // Predicated region
          $region21: #{forward.1} parent=19 // pred_check
            _
          $region22: #{forward.1} parent=19 // pred_check_branch
            %91 = sbr.rel (0) target = $region24
          $region23: #{forward.1} parent=19 // pred_region
            // Predicated region
            $region25: #{forward.1} parent=23 // pred_check
              _
            $region26: #{forward.1} parent=23 // pred_check_branch
              %93 = sbr.rel (0) target = $region28
            $region27: #{forward.1} parent=23 // pred_region
              // Predicated region
              $region40: #{forward.1} parent=27 // pred_check
                _
              $region41: #{forward.1} parent=27 // pred_check_branch
                %112 = sbr.rel (0) target = $region43
              $region42: #{forward.1} parent=27 // pred_region
                loop: start=0, step=1, limit=1
                $region44: #{forward.1} parent=42 // loop_pre_header
                  _
                $region45: #{forward.1} parent=42 // loop_header
                  %s114 = sphi 0, %s118
                  %p115 = scmp.ge.s32.totalorder %s114, 1
                  %s119 = sphi %s89, %s89
                  %s120 = sphi %s87, %s87
                $region46: #{forward.1} parent=42 // loop_header_branch
                  %117 = sbr.rel (%p115) target = $region50
                $region47: #{forward.1} parent=42 // loop_body
                  %v121 = vld [vmem:[%s119] sm:$0xff]
                  %122 = vst [vmem:[%s120] sm:$0xff] %v121
                  %v123 = vld [vmem:[%s119 + $0x10] sm:$0xff]
                  %124 = vst [vmem:[%s120 + $0x8] sm:$0xff] %v123
                  %v125 = vld [vmem:[%s119 + $0x20] sm:$0xff]
                  %126 = vst [vmem:[%s120 + $0x10] sm:$0xff] %v125
                $region48: #{forward.1} parent=42 // loop_footer
                  %s118 = sadd.s32 1, %s114
                $region49: #{forward.1} parent=42 // loop_footer_branch
                  %113 = sbr.rel target = $region45
                $region50: #{forward.1} parent=42 // loop_exit
                  _
              $region43: #{forward.1} parent=27 // pred_fallthru
                _
              // Predicated region
              $region51: #{forward.1} parent=27 // pred_check
                _
              $region52: #{forward.1} parent=27 // pred_check_branch
                %128 = sbr.rel target = $region54
              $region53: #{forward.1} parent=27 // pred_region
                _
              $region54: #{forward.1} parent=27 // pred_fallthru
                _
            $region28: #{forward.1} parent=23 // pred_fallthru
              _
            // Predicated region
            $region29: #{forward.1} parent=23 // pred_check
              _
            $region30: #{forward.1} parent=23 // pred_check_branch
              %95 = sbr.rel target = $region32
            $region31: #{forward.1} parent=23 // pred_region
              loop: start=0, step=1, limit=1
              $region33: #{forward.1} parent=31 // loop_pre_header
                _
              $region34: #{forward.1} parent=31 // loop_header
                %s98 = sphi 0, %s102
                %p99 = scmp.ge.s32.totalorder %s98, 1
                %s103 = sphi %s89, %s89
                %s104 = sphi %s87, %s87
              $region35: #{forward.1} parent=31 // loop_header_branch
                %101 = sbr.rel (%p99) target = $region39
              $region36: #{forward.1} parent=31 // loop_body
                %v105 = vld [vmem:[%s103] sm:$0xff]
                %106 = vst [vmem:[%s104] sm:$0xff] %v105
                %v107 = vld [vmem:[%s103 + $0x10] sm:$0xff]
                %108 = vst [vmem:[%s104 + $0x8] sm:$0xff] %v107
                %v109 = vld [vmem:[%s103 + $0x20] sm:$0xff]
                %110 = vst [vmem:[%s104 + $0x10] sm:$0xff] %v109
              $region37: #{forward.1} parent=31 // loop_footer
                %s102 = sadd.s32 1, %s98
              $region38: #{forward.1} parent=31 // loop_footer_branch
                %97 = sbr.rel target = $region34
              $region39: #{forward.1} parent=31 // loop_exit
                _
            $region32: #{forward.1} parent=23 // pred_fallthru
              _
          $region24: #{forward.1} parent=19 // pred_fallthru
            _
          %129 = vnop
        $region20: #{forward.1} parent=15 // pred_fallthru
          _
      $region16: #{forward.1} parent=5 // pred_fallthru
        _
      %p130 = scmp.le.s32.totalorder 1, %s10
      %p131 = scmp.lt.s32.totalorder %s10, 3
      %p132 = pnand %p130, %p131
      %p133 = pneg %p132
      // Predicated region
      $region55: #{forward.1} parent=5 // pred_check
        _
      $region56: #{forward.1} parent=5 // pred_check_branch
        %135 = sbr.rel (%p132) target = $region58
      $region57: #{forward.1} parent=5 // pred_region
        %s136 = ssub.s32 %s10, 1
        %s137 = sand.u32 %s23, 1
        %s138 = sand.u32 %s23, 1
        %s139 = smul.addr %s138, 24
        %s140 = scalar_lea.vmem [#allocation2], %s139
        // Predicated region
        $region59: #{forward.1} parent=57 // pred_check
          %p141 = pneg %p36
        $region60: #{forward.1} parent=57 // pred_check_branch
          %143 = sbr.rel (%p141) target = $region62
        $region61: #{forward.1} parent=57 // pred_region
          _
        $region62: #{forward.1} parent=57 // pred_fallthru
          _
        %s144 = sand.u32 %s23, 1
        %s145 = sand.u32 %s23, 1
        %s146 = smul.addr %s145, 24
        %s147 = scalar_lea.vmem [#allocation2], %s146
        %p148 = pneg %p36
        %p149 = pneg %p33
        %p150 = pneg %p62
        %p151 = pneg %p59
        %s152 = sand.u32 %s49, 1
        %s153 = scalar_lea.sflag [#allocation4], %s152
        %s154 = sand.u32 %s49, 1
        %s155 = smul.addr %s154, 8
        %s156 = scalar_lea.vmem [#allocation3], %s155
        %v157 = vld [vmem:[%s140] sm:$0xff]
        %s158 = scalar_lea.vmem %s140, 8 [#allocation2]
        %v159 = vld [vmem:[%s158] sm:$0xff]
        %s160 = scalar_lea.vmem %s140, 16 [#allocation2]
        %v161 = vld [vmem:[%s160] sm:$0xff]
        %v162 = vsub.f32 1.0, %v157
        %v163 = vsub.f32 %v162, %v159
        %v164 = vsub.f32 %v163, %v161
        %v165 = vmul.f32 %v164, 5.0
        %v166 = vsub.f32 2.5, %v165
        %v167 = vmul.f32 %v161, 5.0
        %v168 = vsub.f32 2.5, %v167
        %v169 = vmul.f32 %v159, 5.0
        %v170 = vsub.f32 2.5, %v169
        %v171 = vmul.f32 %v157, 5.0
        %v172 = vsub.f32 2.5, %v171
        %v173 = vmin.f32 %v166, 20.0
        %v174 = vmul.f32 %v173, 1.442695
        %v175 = vpow.pop %v174
        %v176 = vmin.f32 %v168, 20.0
        %v177 = vmul.f32 %v176, 1.442695
        %v178 = vpow.pop %v177
        %v179 = vmin.f32 %v170, 20.0
        %v180 = vmul.f32 %v179, 1.442695
        %v181 = vpow.pop %v180
        %v182 = vmin.f32 %v172, 20.0
        %v183 = vmul.f32 %v182, 1.442695
        %v184 = vpow.pop %v183
        %v185 = vadd.f32 %v175, 1.0
        %v186 = vadd.f32 %v178, 1.0
        %v187 = vmul.f32 %v185, %v186
        %v188 = vadd.f32 %v181, 1.0
        %v189 = vmul.f32 %v187, %v188
        %v190 = vadd.f32 %v184, 1.0
        %v191 = vmul.f32 %v189, %v190
        %v192 = vrcp.pop %v191
        %193 = vst [vmem:[%s156] sm:$0xff] %v192
        %s194 = sand.u32 %s49, 1
        %s195 = scalar_lea.sflag [#allocation4], %s194
        %s196 = sand.u32 %s49, 1
        %s197 = smul.addr %s196, 8
        %s198 = scalar_lea.vmem [#allocation3], %s197
        // Predicated region
        $region63: #{forward.1} parent=57 // pred_check
          %p199 = pneg %p59
        $region64: #{forward.1} parent=57 // pred_check_branch
          %201 = sbr.rel (%p199) target = $region66
        $region65: #{forward.1} parent=57 // pred_region
          %s203 = ssub.s32 128, 128
          %204 = vsyncadd %s195, %s203
          %s205 = smul.addr %s15, 128
          %s206 = scalar_lea.hbm %s1, %s205
          %s208 = sshll.u32 %s198, 4
          %s209 = int_to_ptr.vmem [resolvable:$true] %s208
          %211 = dma.vmem_to_hbm [thread:$0]  %s209, 128, %s206, %s195
        $region66: #{forward.1} parent=57 // pred_fallthru
          _
      $region58: #{forward.1} parent=5 // pred_fallthru
        _
      %p212 = scmp.le.s32.totalorder 2, %s10
      // Predicated region
      $region67: #{forward.1} parent=5 // pred_check
        %p213 = pneg %p212
      $region68: #{forward.1} parent=5 // pred_check_branch
        %215 = sbr.rel (%p213) target = $region70
      $region69: #{forward.1} parent=5 // pred_region
        %s216 = ssub.s32 %s10, 2
        // Predicated region
        $region71: #{forward.1} parent=69 // pred_check
          %p217 = pneg %p65
        $region72: #{forward.1} parent=69 // pred_check_branch
          %219 = sbr.rel (%p217) target = $region74
        $region73: #{forward.1} parent=69 // pred_region
          %s220 = sand.u32 %s50, 1
          %s221 = scalar_lea.sflag [#allocation4], %s220
          %s222 = sand.u32 %s50, 1
          %s223 = smul.addr %s222, 8
          %s224 = scalar_lea.vmem [#allocation3], %s223
          %225 = dma.done %s221, 128
        $region74: #{forward.1} parent=69 // pred_fallthru
          _
      $region70: #{forward.1} parent=5 // pred_fallthru
        _
    $region6: #{forward.1} parent=1 // loop_footer
      %s14 = sadd.s32 1, %s10
    $region7: #{forward.1} parent=1 // loop_footer_branch
      %9 = sbr.rel target = $region3
    $region8: #{forward.1} parent=1 // loop_exit
      _
    %226 = vsyncpa [#allocation4], 1
    %s227 = scalar_lea.sflag [#allocation4], 1
    %228 = vsyncpa %s227, 1

</llo_original>
